<compile_context>
chip_gen: v7x
topology: tpu7x:2x2x1
jax: 0.10.0
libtpu: 0.0.40
codegen_flags: <defaults>
</compile_context>

<pallas_src>
import jax
import jax.numpy as jnp
from jax.experimental import pallas as pl
from jax.experimental.pallas import tpu as pltpu


def tower_kernel(x_ref, w1_ref, b1_ref, w2_ref, b2_ref, o_ref):
    # x_ref:  [I, TB]   (transposed input tile, batch on lanes)
    # w1_ref: [H, I]    (PyTorch nn.Linear layout, used directly as LHS)
    # b1_ref: [H, 1]
    # w2_ref: [O, H]
    # b2_ref: [O, 1]
    # o_ref:  [O, TB]
    h = jnp.dot(w1_ref[...], x_ref[...], preferred_element_type=jnp.float32)
    h = jnp.maximum(h + b1_ref[...], 0.0)          # bias + ReLU, kept in f32
    # TODO(synk): nn.Dropout is identity at inference; training-mode dropout
    # would need pltpu.prng_seed/prng_random_bits masking here.
    out = jnp.dot(w2_ref[...], h, preferred_element_type=jnp.float32)
    o_ref[...] = (out + b2_ref[...]).astype(o_ref.dtype)


def tower_forward(x, w1, b1, w2, b2, *, tb=128):
    """x: [B, I]; w1: [H, I]; b1: [H]; w2: [O, H]; b2: [O] (PyTorch Linear layout)."""
    B, I = x.shape
    H = w1.shape[0]
    O = w2.shape[0]

    # Pad batch up to a multiple of the tile so every block is a full,
    # lane-dense (..., tb) tile (tb is a multiple of 128).
    n_tiles = pl.cdiv(B, tb)
    B_pad = n_tiles * tb

    x_t = jnp.transpose(x)                       # [I, B]  (batch -> lane axis)
    if B_pad != B:
        x_t = jnp.pad(x_t, ((0, 0), (0, B_pad - B)))
    b1_c = b1.reshape(H, 1)
    b2_c = b2.reshape(O, 1)

    out_t = pl.pallas_call(
        tower_kernel,
        out_shape=jax.ShapeDtypeStruct((O, B_pad), x.dtype),
        grid=(n_tiles,),
        in_specs=[
            pl.BlockSpec((I, tb), lambda i: (0, i)),   # streamed x tile
            pl.BlockSpec((H, I), lambda i: (0, 0)),    # resident weights/biases
            pl.BlockSpec((H, 1), lambda i: (0, 0)),
            pl.BlockSpec((O, H), lambda i: (0, 0)),
            pl.BlockSpec((O, 1), lambda i: (0, 0)),
        ],
        out_specs=pl.BlockSpec((O, tb), lambda i: (0, i)),
        compiler_params=pltpu.CompilerParams(
            dimension_semantics=("parallel",)),
    )(x_t, w1, b1_c, w2, b2_c)

    return jnp.transpose(out_t)[:B]              # back to [B, O]


def tower_reference(x, w1, b1, w2, b2):
    h = jnp.maximum(x @ w1.T + b1, 0.0)
    return h @ w2.T + b2


if __name__ == "__main__":
    # Shapes per the module: input_size=16, hidden=32, output=4.
    # Batch is > one tile and NOT a multiple of 128 so the run exercises the
    # batch-tiled grid, resident weights, and the padding/slice path.
    B, INPUT, HIDDEN, OUTPUT = 500, 16, 32, 4

    key = jax.random.PRNGKey(0)
    kx, kw1, kb1, kw2, kb2 = jax.random.split(key, 5)

    x = jax.random.normal(kx, (B, INPUT), dtype=jnp.float32)
    # Synthetic parameters (nn.Linear layout: weight [out, in], bias [out]).
    w1 = jax.random.normal(kw1, (HIDDEN, INPUT), dtype=jnp.float32) * 0.1
    b1 = jax.random.normal(kb1, (HIDDEN,), dtype=jnp.float32) * 0.1
    w2 = jax.random.normal(kw2, (OUTPUT, HIDDEN), dtype=jnp.float32) * 0.1
    b2 = jax.random.normal(kb2, (OUTPUT,), dtype=jnp.float32) * 0.1

    out = tower_forward(x, w1, b1, w2, b2)
    out = jax.block_until_ready(out)

    ref = tower_reference(x, w1, b1, w2, b2)
    assert out.shape == (B, OUTPUT), out.shape
    err = jnp.max(jnp.abs(out - ref))
    assert jnp.allclose(out, ref, atol=1e-5, rtol=1e-5), f"max abs err {err}"

    print("KERNEL_OK")
</pallas_src>

<mosaic_0001>
module attributes {stable_mosaic.version = 11 : i64} {
  func.func @tower_kernel(%arg0: i32, %arg1: memref<16x128xf32, #tpu.memory_space<vmem>>, %arg2: memref<32x16xf32, #tpu.memory_space<vmem>>, %arg3: memref<32x1xf32, #tpu.memory_space<vmem>>, %arg4: memref<4x32xf32, #tpu.memory_space<vmem>>, %arg5: memref<4x1xf32, #tpu.memory_space<vmem>>, %arg6: memref<4x128xf32, #tpu.memory_space<vmem>>) attributes {dimension_semantics = [#tpu.dimension_semantics<parallel>], iteration_bounds = array<i64: 4>, scalar_prefetch = 0 : i64, scratch_operands = 0 : i64, tpu.core_type = #tpu.core_type<tc>, window_params = [{transform_indices = @transform_0, window_bounds = array<i64: 16, 128>}, {pipeline_mode = #tpu.pipeline_mode<synchronous>, transform_indices = @transform_1, window_bounds = array<i64: 32, 16>}, {pipeline_mode = #tpu.pipeline_mode<synchronous>, transform_indices = @transform_2, window_bounds = array<i64: 32, 1>}, {pipeline_mode = #tpu.pipeline_mode<synchronous>, transform_indices = @transform_3, window_bounds = array<i64: 4, 32>}, {pipeline_mode = #tpu.pipeline_mode<synchronous>, transform_indices = @transform_4, window_bounds = array<i64: 4, 1>}, {transform_indices = @transform_5, window_bounds = array<i64: 4, 128>}]} {
    %c0 = arith.constant 0 : index
    %c0_0 = arith.constant 0 : index
    %0 = vector.load %arg2[%c0, %c0_0] : memref<32x16xf32, #tpu.memory_space<vmem>>, vector<32x16xf32>
    %c0_1 = arith.constant 0 : index
    %c0_2 = arith.constant 0 : index
    %1 = vector.load %arg1[%c0_1, %c0_2] : memref<16x128xf32, #tpu.memory_space<vmem>>, vector<16x128xf32>
    %cst = arith.constant dense<0.000000e+00> : vector<32x128xf32>
    %2 = tpu.matmul %0, %1, %cst {dimension_numbers = #tpu.dot_dimension_numbers<[1], [0], [0], [1], [0, 0, 1, 1], [], []>} : vector<32x16xf32>, vector<16x128xf32>, vector<32x128xf32> -> vector<32x128xf32>
    %c0_3 = arith.constant 0 : index
    %c0_4 = arith.constant 0 : index
    %3 = vector.load %arg3[%c0_3, %c0_4] : memref<32x1xf32, #tpu.memory_space<vmem>>, vector<32x1xf32>
    %4 = vector.broadcast %3 : vector<32x1xf32> to vector<32x128xf32>
    %5 = arith.addf %2, %4 : vector<32x128xf32>
    %cst_5 = arith.constant 0.000000e+00 : f32
    %6 = vector.broadcast %cst_5 : f32 to vector<32x128xf32>
    %7 = arith.maximumf %5, %6 : vector<32x128xf32>
    %c0_6 = arith.constant 0 : index
    %c0_7 = arith.constant 0 : index
    %8 = vector.load %arg4[%c0_6, %c0_7] : memref<4x32xf32, #tpu.memory_space<vmem>>, vector<4x32xf32>
    %cst_8 = arith.constant dense<0.000000e+00> : vector<4x128xf32>
    %9 = tpu.matmul %8, %7, %cst_8 {dimension_numbers = #tpu.dot_dimension_numbers<[1], [0], [0], [1], [0, 0, 1, 1], [], []>} : vector<4x32xf32>, vector<32x128xf32>, vector<4x128xf32> -> vector<4x128xf32>
    %c0_9 = arith.constant 0 : index
    %c0_10 = arith.constant 0 : index
    %10 = vector.load %arg5[%c0_9, %c0_10] : memref<4x1xf32, #tpu.memory_space<vmem>>, vector<4x1xf32>
    %11 = vector.broadcast %10 : vector<4x1xf32> to vector<4x128xf32>
    %12 = arith.addf %9, %11 : vector<4x128xf32>
    %c0_11 = arith.constant 0 : index
    %c0_12 = arith.constant 0 : index
    %13 = vector.load %arg6[%c0_11, %c0_12] : memref<4x128xf32, #tpu.memory_space<vmem>>, vector<4x128xf32>
    tpu.vector_store %arg6[%c0_11, %c0_12], %12 {strides = array<i32>} : memref<4x128xf32, #tpu.memory_space<vmem>>, vector<4x128xf32>,
    return
  }
  func.func @transform_0(%arg0: i32) -> (i32, i32) {
    %c0_i32 = arith.constant 0 : i32
    %c0_i32_0 = arith.constant 0 : i32
    return %c0_i32, %arg0 : i32, i32
  }
  func.func @transform_1(%arg0: i32) -> (i32, i32) {
    %c0_i32 = arith.constant 0 : i32
    %c0_i32_0 = arith.constant 0 : i32
    %c0_i32_1 = arith.constant 0 : i32
    return %c0_i32, %c0_i32_0 : i32, i32
  }
  func.func @transform_2(%arg0: i32) -> (i32, i32) {
    %c0_i32 = arith.constant 0 : i32
    %c0_i32_0 = arith.constant 0 : i32
    %c0_i32_1 = arith.constant 0 : i32
    return %c0_i32, %c0_i32_0 : i32, i32
  }
  func.func @transform_3(%arg0: i32) -> (i32, i32) {
    %c0_i32 = arith.constant 0 : i32
    %c0_i32_0 = arith.constant 0 : i32
    %c0_i32_1 = arith.constant 0 : i32
    return %c0_i32, %c0_i32_0 : i32, i32
  }
  func.func @transform_4(%arg0: i32) -> (i32, i32) {
    %c0_i32 = arith.constant 0 : i32
    %c0_i32_0 = arith.constant 0 : i32
    %c0_i32_1 = arith.constant 0 : i32
    return %c0_i32, %c0_i32_0 : i32, i32
  }
  func.func @transform_5(%arg0: i32) -> (i32, i32) {
    %c0_i32 = arith.constant 0 : i32
    %c0_i32_0 = arith.constant 0 : i32
    return %c0_i32, %arg0 : i32, i32
  }
}

</mosaic_0001>

<llo_original>
// kernel: tpu_custom_call.1
$region0: #{tpu_custom_call.1}
  #allocation0 [shape = 'u32[]', space=smem, size = 0x4, offset = 0x4, fixed_abs, tag = 'smem constant byte address 0x4 - core index']
  #allocation1 [shape = 'u32[144,128]{1,0:T(1,128)}', space=vmem, size = 0x12000, scoped, tag = 'internal scratch']
  %s0 = inlined_call_operand.vmem [shape: f32[16,512], index: 0, kind: input, shape index: {}]
  %s1 = inlined_call_operand.vmem [shape: f32[32,16], index: 1, kind: input, shape index: {}]
  %s2 = inlined_call_operand.vmem [shape: f32[32,1], index: 2, kind: input, shape index: {}]
  %s3 = inlined_call_operand.vmem [shape: f32[4,32], index: 3, kind: input, shape index: {}]
  %s4 = inlined_call_operand.vmem [shape: f32[4,1], index: 4, kind: input, shape index: {}]
  %s5 = inlined_call_operand.hbm [shape: f32[4,512], index: 5, kind: output, shape index: {}]
  %s6 = sld [smem:[#allocation0]]
  $region91: #{tpu_custom_call.1} parent=0
    _
  %s8 = ssub.s32 1, %s6
  %s9 = scalar_select 0, %s8, %s6
  $region1: #{tpu_custom_call.1} parent=0
    #allocation2 [shape = 'u8[16384]{0}', space=vmem, size = 0x4000, scoped, tag = 'input window, operand 0']
    #allocation3 [shape = 'u8[4096]{0}', space=vmem, size = 0x1000, scoped, tag = 'output window, operand 0']
    #allocation4 [shape = 's32[2]{0}', space=sflag, size = 0x8, scoped, tag = 'scoped memory for tpu_custom_call.1']
    %10 = vsyncpa [#allocation4], 0
    %s11 = scalar_lea.sflag [#allocation4], 1
    %12 = vsyncpa %s11, 0
    loop: start=0, step=1, limit=6
    $region2: #{tpu_custom_call.1} parent=1 // loop_pre_header
      _
    $region3: #{tpu_custom_call.1} parent=1 // loop_header
      %s14 = sphi 0, %s18
      %p15 = scmp.ge.s32.totalorder %s14, 6
      %s24 = sphi 0, %s26
      %s27 = sphi 0, %s24
      %s28 = sphi 0, %s27
      %s44 = sphi 0, %s28
      %s48 = sphi 0, %s48
      %s50 = sphi 0, %s48
      %s51 = sphi 0, %s50
      %s65 = sphi 0, %s51
      %s69 = sphi 0, %s69
      %s71 = sphi 0, %s69
      %s72 = sphi 0, %s71
      %s86 = sphi 0, %s72
      %s90 = sphi 0, %s90
      %s92 = sphi 0, %s90
      %s93 = sphi 0, %s92
      %s107 = sphi 0, %s93
      %s111 = sphi 0, %s111
      %s113 = sphi 0, %s111
      %s114 = sphi 0, %s113
      %s128 = sphi 0, %s114
      %s134 = sphi 0, %s136
      %s137 = sphi 0, %s134
      %s138 = sphi 0, %s137
      %s154 = sphi 0, %s138
    $region4: #{tpu_custom_call.1} parent=1 // loop_header_branch
      %17 = sbr.rel (%p15) target = $region8
    $region5: #{tpu_custom_call.1} parent=1 // loop_body
      %s19 = ssub.s32 %s14, 1
      %s20 = ssub.s32 %s14, 2
      %s21 = sadd.s32 %s14, 1
      %s22 = ssub.s32 %s14, %s21
      %p23 = scmp.eq.s32.totalorder %s22, 0
      %s25 = sadd.s32 %s24, 1
      %s26 = scalar_select %p23, %s24, %s25
      %p29 = pneg %p23
      %p30 = scmp.eq.s32.totalorder %s14, 3
      %p31 = por %p29, %p30
      %p32 = scmp.ne.s32.totalorder %s24, %s27
      %p33 = scmp.eq.s32.totalorder %s14, 0
      %p34 = por %p32, %p33
      %p35 = scmp.ne.s32.totalorder %s24, %s27
      %p36 = scmp.eq.s32.totalorder %s19, 3
      %p37 = por %p35, %p36
      %p38 = scmp.ne.s32.totalorder %s27, %s28
      %p39 = scmp.eq.s32.totalorder %s19, 0
      %p40 = por %p38, %p39
      %p41 = scmp.ne.s32.totalorder %s27, %s28
      %p42 = scmp.eq.s32.totalorder %s20, 3
      %p43 = por %p41, %p42
      %p45 = scmp.ne.s32.totalorder %s28, %s44
      %p46 = scmp.eq.s32.totalorder %s20, 0
      %p47 = por %p45, %p46
      %s49 = sadd.s32 %s48, 1
      %p52 = scmp.eq.s32.totalorder %s14, 3
      %p53 = scmp.ne.s32.totalorder %s48, %s50
      %p54 = scmp.eq.s32.totalorder %s14, 0
      %p55 = por %p53, %p54
      %p56 = scmp.ne.s32.totalorder %s48, %s50
      %p57 = scmp.eq.s32.totalorder %s19, 3
      %p58 = por %p56, %p57
      %p59 = scmp.ne.s32.totalorder %s50, %s51
      %p60 = scmp.eq.s32.totalorder %s19, 0
      %p61 = por %p59, %p60
      %p62 = scmp.ne.s32.totalorder %s50, %s51
      %p63 = scmp.eq.s32.totalorder %s20, 3
      %p64 = por %p62, %p63
      %p66 = scmp.ne.s32.totalorder %s51, %s65
      %p67 = scmp.eq.s32.totalorder %s20, 0
      %p68 = por %p66, %p67
      %s70 = sadd.s32 %s69, 1
      %p73 = scmp.eq.s32.totalorder %s14, 3
      %p74 = scmp.ne.s32.totalorder %s69, %s71
      %p75 = scmp.eq.s32.totalorder %s14, 0
      %p76 = por %p74, %p75
      %p77 = scmp.ne.s32.totalorder %s69, %s71
      %p78 = scmp.eq.s32.totalorder %s19, 3
      %p79 = por %p77, %p78
      %p80 = scmp.ne.s32.totalorder %s71, %s72
      %p81 = scmp.eq.s32.totalorder %s19, 0
      %p82 = por %p80, %p81
      %p83 = scmp.ne.s32.totalorder %s71, %s72
      %p84 = scmp.eq.s32.totalorder %s20, 3
      %p85 = por %p83, %p84
      %p87 = scmp.ne.s32.totalorder %s72, %s86
      %p88 = scmp.eq.s32.totalorder %s20, 0
      %p89 = por %p87, %p88
      %s91 = sadd.s32 %s90, 1
      %p94 = scmp.eq.s32.totalorder %s14, 3
      %p95 = scmp.ne.s32.totalorder %s90, %s92
      %p96 = scmp.eq.s32.totalorder %s14, 0
      %p97 = por %p95, %p96
      %p98 = scmp.ne.s32.totalorder %s90, %s92
      %p99 = scmp.eq.s32.totalorder %s19, 3
      %p100 = por %p98, %p99
      %p101 = scmp.ne.s32.totalorder %s92, %s93
      %p102 = scmp.eq.s32.totalorder %s19, 0
      %p103 = por %p101, %p102
      %p104 = scmp.ne.s32.totalorder %s92, %s93
      %p105 = scmp.eq.s32.totalorder %s20, 3
      %p106 = por %p104, %p105
      %p108 = scmp.ne.s32.totalorder %s93, %s107
      %p109 = scmp.eq.s32.totalorder %s20, 0
      %p110 = por %p108, %p109
      %s112 = sadd.s32 %s111, 1
      %p115 = scmp.eq.s32.totalorder %s14, 3
      %p116 = scmp.ne.s32.totalorder %s111, %s113
      %p117 = scmp.eq.s32.totalorder %s14, 0
      %p118 = por %p116, %p117
      %p119 = scmp.ne.s32.totalorder %s111, %s113
      %p120 = scmp.eq.s32.totalorder %s19, 3
      %p121 = por %p119, %p120
      %p122 = scmp.ne.s32.totalorder %s113, %s114
      %p123 = scmp.eq.s32.totalorder %s19, 0
      %p124 = por %p122, %p123
      %p125 = scmp.ne.s32.totalorder %s113, %s114
      %p126 = scmp.eq.s32.totalorder %s20, 3
      %p127 = por %p125, %p126
      %p129 = scmp.ne.s32.totalorder %s114, %s128
      %p130 = scmp.eq.s32.totalorder %s20, 0
      %p131 = por %p129, %p130
      %s132 = ssub.s32 %s14, %s21
      %p133 = scmp.eq.s32.totalorder %s132, 0
      %s135 = sadd.s32 %s134, 1
      %s136 = scalar_select %p133, %s134, %s135
      %p139 = pneg %p133
      %p140 = scmp.eq.s32.totalorder %s14, 3
      %p141 = por %p139, %p140
      %p142 = scmp.ne.s32.totalorder %s134, %s137
      %p143 = scmp.eq.s32.totalorder %s14, 0
      %p144 = por %p142, %p143
      %p145 = scmp.ne.s32.totalorder %s134, %s137
      %p146 = scmp.eq.s32.totalorder %s19, 3
      %p147 = por %p145, %p146
      %p148 = scmp.ne.s32.totalorder %s137, %s138
      %p149 = scmp.eq.s32.totalorder %s19, 0
      %p150 = por %p148, %p149
      %p151 = scmp.ne.s32.totalorder %s137, %s138
      %p152 = scmp.eq.s32.totalorder %s20, 3
      %p153 = por %p151, %p152
      %p155 = scmp.ne.s32.totalorder %s138, %s154
      %p156 = scmp.eq.s32.totalorder %s20, 0
      %p157 = por %p155, %p156
      %p158 = scmp.le.s32.totalorder 1, %s14
      %p159 = scmp.lt.s32.totalorder %s14, 5
      %p160 = pnand %p158, %p159
      %p161 = pneg %p160
      // Predicated region
      $region9: #{tpu_custom_call.1} parent=5 // pred_check
        _
      $region10: #{tpu_custom_call.1} parent=5 // pred_check_branch
        %163 = sbr.rel (%p160) target = $region12
      $region11: #{tpu_custom_call.1} parent=5 // pred_region
        %s164 = ssub.s32 %s14, 1
        // Predicated region
        $region13: #{tpu_custom_call.1} parent=11 // pred_check
          %p165 = pneg %p61
        $region14: #{tpu_custom_call.1} parent=11 // pred_check_branch
          %167 = sbr.rel (%p165) target = $region16
        $region15: #{tpu_custom_call.1} parent=11 // pred_region
          _
        $region16: #{tpu_custom_call.1} parent=11 // pred_fallthru
          _
        // Predicated region
        $region17: #{tpu_custom_call.1} parent=11 // pred_check
          %p168 = pneg %p82
        $region18: #{tpu_custom_call.1} parent=11 // pred_check_branch
          %170 = sbr.rel (%p168) target = $region20
        $region19: #{tpu_custom_call.1} parent=11 // pred_region
          _
        $region20: #{tpu_custom_call.1} parent=11 // pred_fallthru
          _
        // Predicated region
        $region21: #{tpu_custom_call.1} parent=11 // pred_check
          %p171 = pneg %p103
        $region22: #{tpu_custom_call.1} parent=11 // pred_check_branch
          %173 = sbr.rel (%p171) target = $region24
        $region23: #{tpu_custom_call.1} parent=11 // pred_region
          _
        $region24: #{tpu_custom_call.1} parent=11 // pred_fallthru
          _
        // Predicated region
        $region25: #{tpu_custom_call.1} parent=11 // pred_check
          %p174 = pneg %p124
        $region26: #{tpu_custom_call.1} parent=11 // pred_check_branch
          %176 = sbr.rel (%p174) target = $region28
        $region27: #{tpu_custom_call.1} parent=11 // pred_region
          _
        $region28: #{tpu_custom_call.1} parent=11 // pred_fallthru
          _
      $region12: #{tpu_custom_call.1} parent=5 // pred_fallthru
        _
      %p177 = scmp.lt.s32.totalorder %s14, 4
      // Predicated region
      $region29: #{tpu_custom_call.1} parent=5 // pred_check
        %p178 = pneg %p177
      $region30: #{tpu_custom_call.1} parent=5 // pred_check_branch
        %180 = sbr.rel (%p178) target = $region32
      $region31: #{tpu_custom_call.1} parent=5 // pred_region
        // Predicated region
        $region33: #{tpu_custom_call.1} parent=31 // pred_check
          %p181 = pneg %p34
        $region34: #{tpu_custom_call.1} parent=31 // pred_check_branch
          %183 = sbr.rel (%p181) target = $region36
        $region35: #{tpu_custom_call.1} parent=31 // pred_region
          %s184 = sand.u32 %s24, 1
          %s185 = sand.u32 %s24, 1
          %s186 = smul.addr %s185, 16
          %s187 = scalar_lea.vmem [#allocation2], %s186
          %s188 = smul.addr %s14, 8
          %s189 = scalar_lea.vmem %s0, %s188
          // Predicated region
          $region37: #{tpu_custom_call.1} parent=35 // pred_check
            _
          $region38: #{tpu_custom_call.1} parent=35 // pred_check_branch
            %191 = sbr.rel (0) target = $region40
          $region39: #{tpu_custom_call.1} parent=35 // pred_region
            // Predicated region
            $region41: #{tpu_custom_call.1} parent=39 // pred_check
              _
            $region42: #{tpu_custom_call.1} parent=39 // pred_check_branch
              %193 = sbr.rel (0) target = $region44
            $region43: #{tpu_custom_call.1} parent=39 // pred_region
              // Predicated region
              $region56: #{tpu_custom_call.1} parent=43 // pred_check
                _
              $region57: #{tpu_custom_call.1} parent=43 // pred_check_branch
                %210 = sbr.rel (0) target = $region59
              $region58: #{tpu_custom_call.1} parent=43 // pred_region
                loop: start=0, step=1, limit=1
                $region60: #{tpu_custom_call.1} parent=58 // loop_pre_header
                  _
                $region61: #{tpu_custom_call.1} parent=58 // loop_header
                  %s212 = sphi 0, %s216
                  %p213 = scmp.ge.s32.totalorder %s212, 1
                  %s217 = sphi %s189, %s189
                  %s218 = sphi %s187, %s187
                $region62: #{tpu_custom_call.1} parent=58 // loop_header_branch
                  %215 = sbr.rel (%p213) target = $region66
                $region63: #{tpu_custom_call.1} parent=58 // loop_body
                  %v219 = vld [vmem:[%s217] sm:$0xff]
                  %220 = vst [vmem:[%s218] sm:$0xff] %v219
                  %v221 = vld [vmem:[%s217 + $0x20] sm:$0xff]
                  %222 = vst [vmem:[%s218 + $0x8] sm:$0xff] %v221
                $region64: #{tpu_custom_call.1} parent=58 // loop_footer
                  %s216 = sadd.s32 1, %s212
                $region65: #{tpu_custom_call.1} parent=58 // loop_footer_branch
                  %211 = sbr.rel target = $region61
                $region66: #{tpu_custom_call.1} parent=58 // loop_exit
                  _
              $region59: #{tpu_custom_call.1} parent=43 // pred_fallthru
                _
              // Predicated region
              $region67: #{tpu_custom_call.1} parent=43 // pred_check
                _
              $region68: #{tpu_custom_call.1} parent=43 // pred_check_branch
                %224 = sbr.rel target = $region70
              $region69: #{tpu_custom_call.1} parent=43 // pred_region
                _
              $region70: #{tpu_custom_call.1} parent=43 // pred_fallthru
                _
            $region44: #{tpu_custom_call.1} parent=39 // pred_fallthru
              _
            // Predicated region
            $region45: #{tpu_custom_call.1} parent=39 // pred_check
              _
            $region46: #{tpu_custom_call.1} parent=39 // pred_check_branch
              %195 = sbr.rel target = $region48
            $region47: #{tpu_custom_call.1} parent=39 // pred_region
              loop: start=0, step=1, limit=1
              $region49: #{tpu_custom_call.1} parent=47 // loop_pre_header
                _
              $region50: #{tpu_custom_call.1} parent=47 // loop_header
                %s198 = sphi 0, %s202
                %p199 = scmp.ge.s32.totalorder %s198, 1
                %s203 = sphi %s189, %s189
                %s204 = sphi %s187, %s187
              $region51: #{tpu_custom_call.1} parent=47 // loop_header_branch
                %201 = sbr.rel (%p199) target = $region55
              $region52: #{tpu_custom_call.1} parent=47 // loop_body
                %v205 = vld [vmem:[%s203] sm:$0xff]
                %206 = vst [vmem:[%s204] sm:$0xff] %v205
                %v207 = vld [vmem:[%s203 + $0x20] sm:$0xff]
                %208 = vst [vmem:[%s204 + $0x8] sm:$0xff] %v207
              $region53: #{tpu_custom_call.1} parent=47 // loop_footer
                %s202 = sadd.s32 1, %s198
              $region54: #{tpu_custom_call.1} parent=47 // loop_footer_branch
                %197 = sbr.rel target = $region50
              $region55: #{tpu_custom_call.1} parent=47 // loop_exit
                _
            $region48: #{tpu_custom_call.1} parent=39 // pred_fallthru
              _
          $region40: #{tpu_custom_call.1} parent=35 // pred_fallthru
            _
          %225 = vnop
        $region36: #{tpu_custom_call.1} parent=31 // pred_fallthru
          _
      $region32: #{tpu_custom_call.1} parent=5 // pred_fallthru
        _
      %p226 = scmp.le.s32.totalorder 1, %s14
      %p227 = scmp.lt.s32.totalorder %s14, 5
      %p228 = pnand %p226, %p227
      %p229 = pneg %p228
      // Predicated region
      $region71: #{tpu_custom_call.1} parent=5 // pred_check
        _
      $region72: #{tpu_custom_call.1} parent=5 // pred_check_branch
        %231 = sbr.rel (%p228) target = $region74
      $region73: #{tpu_custom_call.1} parent=5 // pred_region
        %s232 = ssub.s32 %s14, 1
        %s233 = sand.u32 %s27, 1
        %s234 = sand.u32 %s27, 1
        %s235 = smul.addr %s234, 16
        %s236 = scalar_lea.vmem [#allocation2], %s235
        // Predicated region
        $region75: #{tpu_custom_call.1} parent=73 // pred_check
          %p237 = pneg %p40
        $region76: #{tpu_custom_call.1} parent=73 // pred_check_branch
          %239 = sbr.rel (%p237) target = $region78
        $region77: #{tpu_custom_call.1} parent=73 // pred_region
          _
        $region78: #{tpu_custom_call.1} parent=73 // pred_fallthru
          _
        %s240 = sand.u32 %s27, 1
        %s241 = sand.u32 %s27, 1
        %s242 = smul.addr %s241, 16
        %s243 = scalar_lea.vmem [#allocation2], %s242
        %p244 = pneg %p40
        %p245 = pneg %p37
        %p246 = pneg %p61
        %p247 = pneg %p58
        %p248 = pneg %p82
        %p249 = pneg %p79
        %p250 = pneg %p103
        %p251 = pneg %p100
        %p252 = pneg %p124
        %p253 = pneg %p121
        %p254 = pneg %p150
        %p255 = pneg %p147
        %s256 = sand.u32 %s137, 1
        %s257 = scalar_lea.sflag [#allocation4], %s256
        %s258 = sand.u32 %s137, 1
        %s259 = smul.addr %s258, 4
        %s260 = scalar_lea.vmem [#allocation3], %s259
        %v261 = vld [vmem:[%s1] sm:$0xff]
        %v262 = vld [vmem:[%s1 + $0x8] sm:$0xff]
        %v263 = vld [vmem:[%s1 + $0x10] sm:$0xff]
        %v264 = vld [vmem:[%s1 + $0x18] sm:$0xff]
        %v265 = vld [vmem:[%s236] sm:$0xff]
        %v266 = vld [vmem:[%s236 + $0x8] sm:$0xff]
        %v267 = vld [vmem:[%s2] sm:$0xff]
        %v268 = vld [vmem:[%s2 + $0x8] sm:$0xff]
        %v269 = vld [vmem:[%s2 + $0x10] sm:$0xff]
        %v270 = vld [vmem:[%s2 + $0x18] sm:$0xff]
        %272 = vset.pattern.permute.xlu0 0
        %273 = vperm.xlu0 %272, %v267
        %v274 = vpop.permute.xlu0 %273
        %277 = vset.pattern.permute.xlu0 0
        %278 = vperm.xlu0 %277, %v268
        %v279 = vpop.permute.xlu0 %278
        %282 = vset.pattern.permute.xlu0 0
        %283 = vperm.xlu0 %282, %v269
        %v284 = vpop.permute.xlu0 %283
        %287 = vset.pattern.permute.xlu0 0
        %288 = vperm.xlu0 %287, %v270
        %v289 = vpop.permute.xlu0 %288
        %vm291 = vcmask 130048
        %v293 = vsel %vm291, %v261, 0
        %v296 = vsel %vm291, %v262, 0
        %v299 = vsel %vm291, %v263, 0
        %v302 = vsel %vm291, %v264, 0
        %304 = vmatprep.subr.mxu0 0.0
        %305 = vmatpush1.msra.mxu0 %v265
        %306 = vmatprep.subr.mxu0 0.0
        %307 = vmatpush1.msra.mxu0 %v266
        %308 = vmatprep.subr.mxu0 0.0
        %309 = vmatpush1.msra.mxu0 0.0
        %310 = vmatprep.subr.mxu0 0.0
        %311 = vmatpush1.msra.mxu0 0.0
        %312 = vmatprep.subr.mxu0 0.0
        %313 = vmatpush1.msra.mxu0 0.0
        %314 = vmatprep.subr.mxu0 0.0
        %315 = vmatpush1.msra.mxu0 0.0
        %316 = vmatprep.subr.mxu0 0.0
        %317 = vmatpush1.msra.mxu0 0.0
        %318 = vmatprep.subr.mxu0 0.0
        %319 = vmatpush1.msra.mxu0 0.0
        %320 = vmatprep.subr.mxu0 0.0
        %321 = vmatpush1.msra.mxu0 0.0
        %322 = vmatprep.subr.mxu0 0.0
        %323 = vmatpush1.msra.mxu0 0.0
        %324 = vmatprep.subr.mxu0 0.0
        %325 = vmatpush1.msra.mxu0 0.0
        %326 = vmatprep.subr.mxu0 0.0
        %327 = vmatpush1.msra.mxu0 0.0
        %328 = vmatprep.subr.mxu0 0.0
        %329 = vmatpush1.msra.mxu0 0.0
        %330 = vmatprep.subr.mxu0 0.0
        %331 = vmatpush1.msra.mxu0 0.0
        %332 = vmatprep.subr.mxu0 0.0
        %333 = vmatpush1.msra.mxu0 0.0
        %334 = vmatprep.subr.mxu0 0.0
        %335 = vmatpush1.msra.mxu0 0.0
        %336 = vmatprep.subr.mxu0 0.0
        %337 = vmatpush1.msra.mxu0 0.0
        %338 = vmatprep.subr.mxu0 0.0
        %339 = vmatpush1.msra.mxu0 0.0
        %340 = vmatprep.subr.mxu0 0.0
        %341 = vmatpush1.msra.mxu0 0.0
        %342 = vmatprep.subr.mxu0 0.0
        %343 = vmatpush1.msra.mxu0 0.0
        %344 = vmatprep.subr.mxu0 0.0
        %345 = vmatpush1.msra.mxu0 0.0
        %346 = vmatprep.subr.mxu0 0.0
        %347 = vmatpush1.msra.mxu0 0.0
        %348 = vmatprep.subr.mxu0 0.0
        %349 = vmatpush1.msra.mxu0 0.0
        %350 = vmatprep.subr.mxu0 0.0
        %351 = vmatpush1.msra.mxu0 0.0
        %352 = vmatprep.subr.mxu0 0.0
        %353 = vmatpush1.msra.mxu0 0.0
        %354 = vmatprep.subr.mxu0 0.0
        %355 = vmatpush1.msra.mxu0 0.0
        %356 = vmatprep.subr.mxu0 0.0
        %357 = vmatpush1.msra.mxu0 0.0
        %358 = vmatprep.subr.mxu0 0.0
        %359 = vmatpush1.msra.mxu0 0.0
        %360 = vmatprep.subr.mxu0 0.0
        %361 = vmatpush1.msra.mxu0 0.0
        %362 = vmatprep.subr.mxu0 0.0
        %363 = vmatpush1.msra.mxu0 0.0
        %364 = vmatprep.subr.mxu0 0.0
        %365 = vmatpush1.msra.mxu0 0.0
        %366 = vmatprep.subr.mxu0 0.0
        %367 = vmatpush1.msra.mxu0 0.0
        %368 = vmatprep.mubr.f32.mxu0 0.0
        %369 = vmatmul.mubr.f32.gmra.mrb[0].mxu0 %v293
        %v370 = vpop.f32.mrb[0].mxu0
        %v371 = vadd.f32 %v274, %v370
        %v372 = vpop.f32.mrb[0].mxu0
        %373 = vmatprep.mubr.f32.mxu0 0.0
        %374 = vmatmul.mubr.f32.gmra.mrb[0].mxu0 %v296
        %v375 = vpop.f32.mrb[0].mxu0
        %v376 = vadd.f32 %v279, %v375
        %v377 = vpop.f32.mrb[0].mxu0
        %378 = vmatprep.mubr.f32.mxu0 0.0
        %379 = vmatmul.mubr.f32.gmra.mrb[0].mxu0 %v299
        %v380 = vpop.f32.mrb[0].mxu0
        %v381 = vadd.f32 %v284, %v380
        %v382 = vpop.f32.mrb[0].mxu0
        %383 = vmatprep.mubr.f32.mxu0 0.0
        %384 = vmatmul.mubr.f32.gmra.mrb[0].mxu0 %v302
        %v385 = vpop.f32.mrb[0].mxu0
        %v386 = vadd.f32 %v289, %v385
        %v387 = vpop.f32.mrb[0].mxu0
        %388 = vdwg.mxu0
        %v389 = vmax.f32 %v371, 0.0
        %v390 = vmax.f32 %v376, 0.0
        %v391 = vmax.f32 %v381, 0.0
        %v392 = vmax.f32 %v386, 0.0
        %v393 = vld [vmem:[%s3] sm:$0xf]
        %v394 = vld [vmem:[%s4] sm:$0xf]
        %396 = vset.pattern.permute.xlu0 0
        %397 = vperm.xlu0 %396, %v394
        %v398 = vpop.permute.xlu0 %397
        %vm400 = vcmask 261120
        %v402 = vsel %vm400, %v393, 0
        %404 = vmatprep.subr.mxu0 0.0
        %405 = vmatpush1.msra.mxu0 %v389
        %406 = vmatprep.subr.mxu0 0.0
        %407 = vmatpush1.msra.mxu0 %v390
        %408 = vmatprep.subr.mxu0 0.0
        %409 = vmatpush1.msra.mxu0 %v391
        %410 = vmatprep.subr.mxu0 0.0
        %411 = vmatpush1.msra.mxu0 %v392
        %412 = vmatprep.subr.mxu0 0.0
        %413 = vmatpush1.msra.mxu0 0.0
        %414 = vmatprep.subr.mxu0 0.0
        %415 = vmatpush1.msra.mxu0 0.0
        %416 = vmatprep.subr.mxu0 0.0
        %417 = vmatpush1.msra.mxu0 0.0
        %418 = vmatprep.subr.mxu0 0.0
        %419 = vmatpush1.msra.mxu0 0.0
        %420 = vmatprep.subr.mxu0 0.0
        %421 = vmatpush1.msra.mxu0 0.0
        %422 = vmatprep.subr.mxu0 0.0
        %423 = vmatpush1.msra.mxu0 0.0
        %424 = vmatprep.subr.mxu0 0.0
        %425 = vmatpush1.msra.mxu0 0.0
        %426 = vmatprep.subr.mxu0 0.0
        %427 = vmatpush1.msra.mxu0 0.0
        %428 = vmatprep.subr.mxu0 0.0
        %429 = vmatpush1.msra.mxu0 0.0
        %430 = vmatprep.subr.mxu0 0.0
        %431 = vmatpush1.msra.mxu0 0.0
        %432 = vmatprep.subr.mxu0 0.0
        %433 = vmatpush1.msra.mxu0 0.0
        %434 = vmatprep.subr.mxu0 0.0
        %435 = vmatpush1.msra.mxu0 0.0
        %436 = vmatprep.subr.mxu0 0.0
        %437 = vmatpush1.msra.mxu0 0.0
        %438 = vmatprep.subr.mxu0 0.0
        %439 = vmatpush1.msra.mxu0 0.0
        %440 = vmatprep.subr.mxu0 0.0
        %441 = vmatpush1.msra.mxu0 0.0
        %442 = vmatprep.subr.mxu0 0.0
        %443 = vmatpush1.msra.mxu0 0.0
        %444 = vmatprep.subr.mxu0 0.0
        %445 = vmatpush1.msra.mxu0 0.0
        %446 = vmatprep.subr.mxu0 0.0
        %447 = vmatpush1.msra.mxu0 0.0
        %448 = vmatprep.subr.mxu0 0.0
        %449 = vmatpush1.msra.mxu0 0.0
        %450 = vmatprep.subr.mxu0 0.0
        %451 = vmatpush1.msra.mxu0 0.0
        %452 = vmatprep.subr.mxu0 0.0
        %453 = vmatpush1.msra.mxu0 0.0
        %454 = vmatprep.subr.mxu0 0.0
        %455 = vmatpush1.msra.mxu0 0.0
        %456 = vmatprep.subr.mxu0 0.0
        %457 = vmatpush1.msra.mxu0 0.0
        %458 = vmatprep.subr.mxu0 0.0
        %459 = vmatpush1.msra.mxu0 0.0
        %460 = vmatprep.subr.mxu0 0.0
        %461 = vmatpush1.msra.mxu0 0.0
        %462 = vmatprep.subr.mxu0 0.0
        %463 = vmatpush1.msra.mxu0 0.0
        %464 = vmatprep.subr.mxu0 0.0
        %465 = vmatpush1.msra.mxu0 0.0
        %466 = vmatprep.subr.mxu0 0.0
        %467 = vmatpush1.msra.mxu0 0.0
        %468 = vmatprep.mubr.f32.mxu0 0.0
        %469 = vmatmul.mubr.f32.gmra.mrb[0].mxu0 %v402
        %v470 = vpop.f32.mrb[0].mxu0
        %v471 = vadd.f32 %v398, %v470
        %v472 = vpop.f32.mrb[0].mxu0
        %473 = vdwg.mxu0
        %474 = vst [vmem:[%s260] sm:$0xf] %v471
        %s475 = sand.u32 %s137, 1
        %s476 = scalar_lea.sflag [#allocation4], %s475
        %s477 = sand.u32 %s137, 1
        %s478 = smul.addr %s477, 4
        %s479 = scalar_lea.vmem [#allocation3], %s478
        // Predicated region
        $region79: #{tpu_custom_call.1} parent=73 // pred_check
          %p480 = pneg %p147
        $region80: #{tpu_custom_call.1} parent=73 // pred_check_branch
          %482 = sbr.rel (%p480) target = $region82
        $region81: #{tpu_custom_call.1} parent=73 // pred_region
          %s484 = ssub.s32 64, 64
          %485 = vsyncadd %s476, %s484
          %s486 = smul.addr %s19, 64
          %s487 = scalar_lea.hbm %s5, %s486
          %s489 = sshll.u32 %s479, 4
          %s490 = int_to_ptr.vmem [resolvable:$true] %s489
          %492 = dma.vmem_to_hbm [thread:$0]  %s490, 64, %s487, %s476
        $region82: #{tpu_custom_call.1} parent=73 // pred_fallthru
          _
      $region74: #{tpu_custom_call.1} parent=5 // pred_fallthru
        _
      %p493 = scmp.le.s32.totalorder 2, %s14
      // Predicated region
      $region83: #{tpu_custom_call.1} parent=5 // pred_check
        %p494 = pneg %p493
      $region84: #{tpu_custom_call.1} parent=5 // pred_check_branch
        %496 = sbr.rel (%p494) target = $region86
      $region85: #{tpu_custom_call.1} parent=5 // pred_region
        %s497 = ssub.s32 %s14, 2
        // Predicated region
        $region87: #{tpu_custom_call.1} parent=85 // pred_check
          %p498 = pneg %p153
        $region88: #{tpu_custom_call.1} parent=85 // pred_check_branch
          %500 = sbr.rel (%p498) target = $region90
        $region89: #{tpu_custom_call.1} parent=85 // pred_region
          %s501 = sand.u32 %s138, 1
          %s502 = scalar_lea.sflag [#allocation4], %s501
          %s503 = sand.u32 %s138, 1
          %s504 = smul.addr %s503, 4
          %s505 = scalar_lea.vmem [#allocation3], %s504
          %506 = dma.done %s502, 64
        $region90: #{tpu_custom_call.1} parent=85 // pred_fallthru
          _
      $region86: #{tpu_custom_call.1} parent=5 // pred_fallthru
        _
    $region6: #{tpu_custom_call.1} parent=1 // loop_footer
      %s18 = sadd.s32 1, %s14
    $region7: #{tpu_custom_call.1} parent=1 // loop_footer_branch
      %13 = sbr.rel target = $region3
    $region8: #{tpu_custom_call.1} parent=1 // loop_exit
      _
    %507 = vsyncpa [#allocation4], 1
    %s508 = scalar_lea.sflag [#allocation4], 1
    %509 = vsyncpa %s508, 1

</llo_original>
